<compile_context>
chip_gen: v7x
topology: tpu7x:2x2x1
jax: 0.10.0
libtpu: 0.0.40
codegen_flags: <defaults>
</compile_context>

<pallas_src>
import functools
import math

import jax
import jax.numpy as jnp
from jax.experimental import pallas as pl
from jax.experimental.pallas import tpu as pltpu


# ----------------------------------------------------------------------------
# Kernel 1: PathEncoderBatch (the reference module) fused with the
#           attention-bias assembly, emitted directly in [B, H, S_pad, S_pad].
# ----------------------------------------------------------------------------
def bias_assembly_kernel(nnodes_ref, tvd_ref, dist_ref, path_ref, w_ref,
                         ab_ref, sp_ref, out_ref, *,
                         n_graph, seq_len, seq_pad, max_len, num_heads,
                         neg_fill):
    SP = seq_pad
    S = seq_len
    H = num_heads

    ii = jax.lax.broadcasted_iota(jnp.int32, (SP, SP), 0)
    jj = jax.lax.broadcasted_iota(jnp.int32, (SP, SP), 1)
    in_seq = jnp.logical_and(ii < S, jj < S)              # real (token) positions
    region = jnp.logical_and(jnp.logical_and(ii >= 1, jj >= 1), in_seq)
    tok_mask = jnp.logical_and(jnp.logical_or(ii == 0, jj == 0),
                               in_seq).astype(jnp.float32)

    for b in range(n_graph):
        ab2 = 2.0 * ab_ref[b]                              # [SP, SP]
        last = (b == n_graph - 1)
        if not last:
            src = b + 1                                    # g_list[1:] shift
            nv = nnodes_ref[src]                           # SMEM scalar
            # einsum('xyld,lhd->xyh') as ONE matmul; the kron-expanded table
            # lands the result head-major: pe_all[x, h*SP + y].
            pe_all = jnp.dot(path_ref[src], w_ref[...],
                             preferred_element_type=jnp.float32)
            cdist = jnp.clip(dist_ref[src].astype(jnp.float32), 1.0,
                             float(max_len))               # torch.clamp(d,1,L)
            valid = jnp.logical_and(
                jnp.logical_and(ii >= 1, ii <= nv),
                jnp.logical_and(jj >= 1, jj <= nv))        # [:num_nodes,:num_nodes]
        for h in range(H):
            if last:
                # last output slot of the reference loop stays at the -1000
                # fill: no matmul, no divide, no extra DMA.
                path_term = jnp.full((SP, SP), -1000.0, jnp.float32)
            else:
                pe_h = pe_all[:, h * SP:(h + 1) * SP]      # static lane slice
                path_term = jnp.where(valid, pe_h / cdist, -1000.0)
            core = ab2 + jnp.where(region, sp_ref[b, h] + path_term,
                                   tok_mask * tvd_ref[h])
            out_ref[b, h] = jnp.where(in_seq, core, neg_fill)


def run_bias_assembly(num_nodes, tvd, dist, path_data, emb_kh, attn_bias,
                      spatial, *, max_len, seq_pad, neg_fill=-1e9):
    """num_nodes:[B] int, tvd:[H] f32 (graph-token virtual distance),
    dist:[B,N,N] int, path_data:[B,N,N,max_len,feat] f32, emb_kh:[K,H] f32,
    attn_bias:[B,S,S] f32, spatial:[B,H,N,N] f32  ->  [B,H,S_pad,S_pad]."""
    B, N, _ = dist.shape
    K, H = emb_kh.shape
    S = N + 1
    SP = seq_pad
    pad_n = SP - 1 - N

    # Host-side layout prep: pure reshapes + zero pads into the aligned,
    # (1,1)-offset layout the kernel consumes (no transposes of big tensors).
    path_flat = path_data.reshape(B, N, N * K)
    path_pad = jnp.pad(path_flat, ((0, 0), (1, pad_n), (K, pad_n * K)))
    dist_pad = jnp.pad(dist.astype(jnp.int32),
                       ((0, 0), (1, pad_n), (1, pad_n)))
    ab_pad = jnp.pad(attn_bias, ((0, 0), (0, SP - S), (0, SP - S)))
    sp_pad = jnp.pad(spatial, ((0, 0), (0, 0), (1, pad_n), (1, pad_n)))
    # Kron-expanded table: W[y*K + k, h*SP + y] = emb_kh[k, h].
    w_kron = jnp.einsum('kh,yz->ykhz', emb_kh,
                        jnp.eye(SP, dtype=emb_kh.dtype)).reshape(SP * K, H * SP)

    return pl.pallas_call(
        functools.partial(bias_assembly_kernel, n_graph=B, seq_len=S,
                          seq_pad=SP, max_len=max_len, num_heads=H,
                          neg_fill=neg_fill),
        out_shape=jax.ShapeDtypeStruct((B, H, SP, SP), jnp.float32),
        in_specs=[
            pl.BlockSpec(memory_space=pltpu.MemorySpace.SMEM),   # num_nodes
            pl.BlockSpec(memory_space=pltpu.MemorySpace.SMEM),   # token dist
            pl.BlockSpec(memory_space=pltpu.MemorySpace.VMEM),   # dist (padded)
            pl.BlockSpec(memory_space=pltpu.MemorySpace.VMEM),   # path data
            pl.BlockSpec(memory_space=pltpu.MemorySpace.VMEM),   # kron table
            pl.BlockSpec(memory_space=pltpu.MemorySpace.VMEM),   # attn_bias
            pl.BlockSpec(memory_space=pltpu.MemorySpace.VMEM),   # spatial
        ],
        out_specs=pl.BlockSpec(memory_space=pltpu.MemorySpace.VMEM),
    )(num_nodes.astype(jnp.int32), tvd.astype(jnp.float32),
      dist_pad, path_pad, w_kron, ab_pad, sp_pad)


# ----------------------------------------------------------------------------
# Kernel 2: full Graphormer encoder stack + prediction head, one pallas_call.
#           grid = (graph, layer); residual stream lives in the revisited
#           output block; head folded into the last-layer epilogue.
# ----------------------------------------------------------------------------
def encoder_stack_kernel(h_ref, bias_ref, wa_ref, w2_ref, vec_ref,
                         lnw_ref, lnb_ref, fnw_ref, fnb_ref, ow_ref, ob_ref,
                         out_ref, cls_ref, *, num_heads, ffn_dim, num_layers):
    l = pl.program_id(1)

    @pl.when(l == 0)
    def _init():
        out_ref[...] = h_ref[...]

    _, SP, D = out_ref.shape
    H, F = num_heads, ffn_dim
    dh = D // H
    eps = 1e-5

    x = out_ref[0]                               # [SP, D] residual stream
    wa = wa_ref[0]                               # [D, 3D + D + F]
    w2 = w2_ref[0]                               # [F, D]
    vec = vec_ref[0]                             # [1, 9D + F]

    w_qkv = wa[:, 0:3 * D]
    w_o = wa[:, 3 * D:4 * D]
    w_1 = wa[:, 4 * D:4 * D + F]

    b_qkv = vec[:, 0:3 * D]
    b_o = vec[:, 3 * D:4 * D]
    ln1w = vec[:, 4 * D:5 * D]
    ln1b = vec[:, 5 * D:6 * D]
    b_1 = vec[:, 6 * D:6 * D + F]
    b_2 = vec[:, 6 * D + F:7 * D + F]
    ln2w = vec[:, 7 * D + F:8 * D + F]
    ln2b = vec[:, 8 * D + F:9 * D + F]

    # Fused QKV projection (1/sqrt(dh) pre-folded into the Q columns/bias).
    qkv = jnp.dot(x, w_qkv, preferred_element_type=jnp.float32) + b_qkv
    q = qkv[:, 0 * D:1 * D]
    k = qkv[:, 1 * D:2 * D]
    v = qkv[:, 2 * D:3 * D]

    # Per-head scores/softmax/PV (H=4, unrolled) on aligned [SP, SP] tiles;
    # heads are lane-concatenated and pushed through ONE D-wide output
    # projection instead of H matmuls with contraction dh.
    o_parts = []
    for hd in range(H):
        c0 = hd * dh
        s = jax.lax.dot_general(q[:, c0:c0 + dh], k[:, c0:c0 + dh],
                                (((1,), (1,)), ((), ())),
                                preferred_element_type=jnp.float32)
        s = s + bias_ref[0, hd]
        m = jnp.max(s, axis=-1, keepdims=True)
        p = jnp.exp(s - m)
        p = p / jnp.sum(p, axis=-1, keepdims=True)
        o_parts.append(jnp.dot(p, v[:, c0:c0 + dh],
                               preferred_element_type=jnp.float32))
    o_cat = jnp.concatenate(o_parts, axis=1)                     # [SP, D]
    attn = jnp.dot(o_cat, w_o, preferred_element_type=jnp.float32) + b_o

    # residual + LayerNorm 1
    x1 = x + attn
    mu = jnp.mean(x1, axis=-1, keepdims=True)
    var = jnp.mean((x1 - mu) ** 2, axis=-1, keepdims=True)
    x1 = (x1 - mu) * jax.lax.rsqrt(var + eps) * ln1w + ln1b

    # ReLU FFN + residual + LayerNorm 2
    hid = jnp.maximum(
        jnp.dot(x1, w_1, preferred_element_type=jnp.float32) + b_1, 0.0)
    ffn = jnp.dot(hid, w2, preferred_element_type=jnp.float32) + b_2
    x2 = x1 + ffn
    mu = jnp.mean(x2, axis=-1, keepdims=True)
    var = jnp.mean((x2 - mu) ** 2, axis=-1, keepdims=True)
    y = (x2 - mu) * jax.lax.rsqrt(var + eps) * ln2w + ln2b
    out_ref[0] = y

    # Prediction head folded into the last-layer epilogue: final LN + fn +
    # out_proj on the graph (CLS) token only.
    @pl.when(l == num_layers - 1)
    def _head():
        x0 = y[0:1, :]
        mu0 = jnp.mean(x0, axis=-1, keepdims=True)
        var0 = jnp.mean((x0 - mu0) ** 2, axis=-1, keepdims=True)
        xn = ((x0 - mu0) * jax.lax.rsqrt(var0 + eps) * lnw_ref[...]
              + lnb_ref[...])
        z = jnp.dot(xn, fnw_ref[...],
                    preferred_element_type=jnp.float32) + fnb_ref[...]
        cls_ref[0] = (jnp.dot(z, ow_ref[...],
                              preferred_element_type=jnp.float32) + ob_ref[...])


def run_encoder_stack(h_pad, bias, packed, params, *, num_heads, ffn_dim,
                      n_tasks):
    B, SP, D = h_pad.shape
    H = num_heads
    wa, w2, vec = packed['wa'], packed['w2'], packed['vec']
    L = wa.shape[0]
    _, cls = pl.pallas_call(
        functools.partial(encoder_stack_kernel, num_heads=H, ffn_dim=ffn_dim,
                          num_layers=L),
        out_shape=(jax.ShapeDtypeStruct((B, SP, D), jnp.float32),
                   jax.ShapeDtypeStruct((B, 1, n_tasks), jnp.float32)),
        grid=(B, L),
        in_specs=[
            pl.BlockSpec((1, SP, D), lambda b, l: (b, 0, 0)),
            pl.BlockSpec((1, H, SP, SP), lambda b, l: (b, 0, 0, 0)),
            pl.BlockSpec((1, wa.shape[1], wa.shape[2]), lambda b, l: (l, 0, 0)),
            pl.BlockSpec((1, w2.shape[1], w2.shape[2]), lambda b, l: (l, 0, 0)),
            pl.BlockSpec((1, 1, vec.shape[2]), lambda b, l: (l, 0, 0)),
            pl.BlockSpec((1, D), lambda b, l: (0, 0)),        # final_ln_w
            pl.BlockSpec((1, D), lambda b, l: (0, 0)),        # final_ln_b
            pl.BlockSpec((D, 64), lambda b, l: (0, 0)),       # fn_w
            pl.BlockSpec((1, 64), lambda b, l: (0, 0)),       # fn_b
            pl.BlockSpec((64, n_tasks), lambda b, l: (0, 0)), # out_w
            pl.BlockSpec((1, n_tasks), lambda b, l: (0, 0)),  # out_b
        ],
        out_specs=(pl.BlockSpec((1, SP, D), lambda b, l: (b, 0, 0)),
                   pl.BlockSpec((1, 1, n_tasks), lambda b, l: (b, 0, 0))),
        compiler_params=pltpu.CompilerParams(
            dimension_semantics=("parallel", "arbitrary")),
    )(h_pad, bias, wa, w2, vec,
      params['final_ln_w'], params['final_ln_b'],
      params['fn_w'], params['fn_b'], params['out_w'], params['out_b'])
    return cls.reshape(B, n_tasks)


# ----------------------------------------------------------------------------
# Parameters (deterministic, matching the PyTorch __init__ / init_params)
# ----------------------------------------------------------------------------
def init_graphormer_params(key, cfg):
    D, H, F = cfg['hidden_dim'], cfg['num_heads'], cfg['ffn_dim']
    n_layers = cfg['n_layers']
    std_lin = 0.02 / math.sqrt(n_layers)
    std_emb = 0.02
    keys = iter(jax.random.split(key, 64 + 16 * n_layers))
    nk = lambda: next(keys)
    rnd = lambda shape, std: jax.random.normal(nk(), shape, jnp.float32) * std

    p = {
        'atom_emb': rnd((1024 * 24 + 1, D), std_emb),
        'deg_in_emb': rnd((cfg['max_degree'] + 1, D), std_emb),
        'deg_out_emb': rnd((cfg['max_degree'] + 1, D), std_emb),
        'spatial_emb': rnd((cfg['max_dist'] + 2, cfg['sp_num_heads']), std_emb),
        'path_emb': rnd((cfg['max_len'] * cfg['sp_num_heads'],
                         cfg['edge_feat_dim']), std_emb),
        'graph_token': rnd((1, D), std_emb),
        'graph_token_virtual_distance': rnd((1, H), std_emb),
        'final_ln_w': jnp.ones((1, D), jnp.float32),
        'final_ln_b': jnp.zeros((1, D), jnp.float32),
        'fn_w': rnd((D, 64), std_lin),
        'fn_b': jnp.zeros((1, 64), jnp.float32),
        'out_w': rnd((64, cfg['n_tasks']), std_lin),
        'out_b': jnp.zeros((1, cfg['n_tasks']), jnp.float32),
        # fc1/fc2 exist in the module but are unused (node_feature_3d is None).
        'fc1_w': rnd((2 * D, D), std_lin),
        'fc1_b': jnp.zeros((1, D), jnp.float32),
        'fc2_w': rnd((D, D), std_lin),
        'fc2_b': jnp.zeros((1, D), jnp.float32),
    }
    layers = []
    for _ in range(n_layers):
        layers.append({
            'wq': rnd((D, D), std_lin), 'bq': jnp.zeros((1, D), jnp.float32),
            'wk': rnd((D, D), std_lin), 'bk': jnp.zeros((1, D), jnp.float32),
            'wv': rnd((D, D), std_lin), 'bv': jnp.zeros((1, D), jnp.float32),
            'wo': rnd((D, D), std_lin), 'bo': jnp.zeros((1, D), jnp.float32),
            'ln1_w': jnp.ones((1, D), jnp.float32),
            'ln1_b': jnp.zeros((1, D), jnp.float32),
            'w1': rnd((D, F), std_lin), 'b1': jnp.zeros((1, F), jnp.float32),
            'w2': rnd((F, D), std_lin), 'b2': jnp.zeros((1, D), jnp.float32),
            'ln2_w': jnp.ones((1, D), jnp.float32),
            'ln2_b': jnp.zeros((1, D), jnp.float32),
        })
    p['layers'] = layers
    return p


def pack_params(params, cfg):
    """Per-layer params packed into 3 stacked slabs (fewer DMA streams), the
    1/sqrt(dh) softmax scale folded into the Q columns, and the PathEncoder
    table flattened to its [max_len*feat, H] matmul form."""
    D, H, F = cfg['hidden_dim'], cfg['num_heads'], cfg['ffn_dim']
    dh = D // H
    scale = 1.0 / math.sqrt(dh)
    wa, w2s, vecs = [], [], []
    for lp in params['layers']:
        w_qkv = jnp.concatenate([lp['wq'] * scale, lp['wk'], lp['wv']], axis=1)
        wa.append(jnp.concatenate([w_qkv, lp['wo'], lp['w1']], axis=1))
        w2s.append(lp['w2'])
        vecs.append(jnp.concatenate(
            [lp['bq'] * scale, lp['bk'], lp['bv'], lp['bo'],
             lp['ln1_w'], lp['ln1_b'], lp['b1'], lp['b2'],
             lp['ln2_w'], lp['ln2_b']], axis=1))
    emb_kh = jnp.transpose(
        params['path_emb'].reshape(cfg['max_len'], cfg['sp_num_heads'],
                                   cfg['edge_feat_dim']),
        (0, 2, 1)).reshape(cfg['max_len'] * cfg['edge_feat_dim'],
                           cfg['sp_num_heads'])
    return {
        'wa': jnp.stack(wa),          # [L, D, 3D + D + F]
        'w2': jnp.stack(w2s),         # [L, F, D]
        'vec': jnp.stack(vecs),       # [L, 1, 9D + F]
        'path_emb_kh': emb_kh,        # [max_len*feat, H]
    }


# ----------------------------------------------------------------------------
# Forward pass
# ----------------------------------------------------------------------------
def graphormer_forward(params, packed, x_atoms, attn_bias, in_degree,
                       out_degree, dist, path_data, num_nodes, cfg):
    """x_atoms:[B,N,F_atom] int  attn_bias:[B,N+1,N+1] f32
    in/out_degree:[B,N] int      dist:[B,N,N] int (shortest dist, -1 = pad)
    path_data:[B,N,N,max_len,feat] f32  num_nodes:[B] int."""
    B, N = x_atoms.shape[:2]
    H, D = cfg['num_heads'], cfg['hidden_dim']
    S = N + 1
    SP = ((S + 7) // 8) * 8          # sublane-aligned (padded) sequence length
    assert cfg['sp_num_heads'] == H

    # --- DegreeEncoder / atom embedding: XLA gathers (glue) ------------------
    deg_in = jnp.clip(in_degree, 0, cfg['max_degree'])
    deg_out = jnp.clip(out_degree, 0, cfg['max_degree'])
    degree_embedding = (params['deg_in_emb'][deg_in]
                        + params['deg_out_emb'][deg_out])            # [B,N,D]

    node_feature = params['atom_emb'][x_atoms].sum(axis=-2) + degree_embedding
    graph_token = jnp.broadcast_to(params['graph_token'][None], (B, 1, D))
    h = jnp.concatenate([graph_token, node_feature], axis=1).astype(jnp.float32)
    h_pad = jnp.pad(h, ((0, 0), (0, SP - S), (0, 0)))                # [B,SP,D]
    # input_dropout: identity at inference.

    # --- SpatialEncoder: embedding gather (glue) ------------------------------
    spatial = params['spatial_emb'][jnp.clip(dist, -1, cfg['max_dist']) + 1]
    spatial = jnp.transpose(spatial, (0, 3, 1, 2))                   # [B,H,N,N]

    # --- PathEncoderBatch + bias assembly, fused in one Pallas kernel ---------
    # attn_bias is added twice in the reference forward (clone + final add).
    bias = run_bias_assembly(
        num_nodes, params['graph_token_virtual_distance'].reshape(-1),
        dist, path_data, packed['path_emb_kh'], attn_bias, spatial,
        max_len=cfg['max_len'], seq_pad=SP)                          # [B,H,SP,SP]

    # --- encoder stack + prediction head (Pallas, fused) ----------------------
    return run_encoder_stack(h_pad, bias, packed, params, num_heads=H,
                             ffn_dim=cfg['ffn_dim'], n_tasks=cfg['n_tasks'])


# ----------------------------------------------------------------------------
if __name__ == "__main__":
    cfg = dict(n_layers=2, num_heads=4, sp_num_heads=4, hidden_dim=32,
               ffn_dim=64, n_tasks=12, max_degree=5, max_dist=2,
               max_len=2, edge_feat_dim=7)
    B, N, F_atom = 2, 8, 3

    key = jax.random.PRNGKey(0)
    (k_params, k_x, k_bias, k_din, k_dout, k_dist, k_path) = jax.random.split(key, 7)

    params = init_graphormer_params(k_params, cfg)
    packed = pack_params(params, cfg)

    x_atoms = jax.random.randint(k_x, (B, N, F_atom), 0, 1024 * 24)
    attn_bias = jax.random.normal(k_bias, (B, N + 1, N + 1), jnp.float32)
    in_degree = jax.random.randint(k_din, (B, N), 0, 7)
    out_degree = jax.random.randint(k_dout, (B, N), 0, 7)
    dist = jax.random.randint(k_dist, (B, N, N), -1, 4)
    path_data = jax.random.normal(
        k_path, (B, N, N, cfg['max_len'], cfg['edge_feat_dim']), jnp.float32)
    num_nodes = jnp.full((B,), N, jnp.int32)

    out = graphormer_forward(params, packed, x_atoms, attn_bias, in_degree,
                             out_degree, dist, path_data, num_nodes, cfg)
    out = jax.block_until_ready(out)
    assert out.shape == (B, cfg['n_tasks'])
    assert bool(jnp.all(jnp.isfinite(out)))
    print("KERNEL_OK")
</pallas_src>

<mosaic_0001>
module attributes {stable_mosaic.version = 11 : i64} {
  func.func @bias_assembly_kernel(%arg0: memref<2xi32, #tpu.memory_space<smem>>, %arg1: memref<4xf32, #tpu.memory_space<smem>>, %arg2: memref<2x16x16xi32, #tpu.memory_space<vmem>>, %arg3: memref<2x16x224xf32, #tpu.memory_space<vmem>>, %arg4: memref<224x64xf32, #tpu.memory_space<vmem>>, %arg5: memref<2x16x16xf32, #tpu.memory_space<vmem>>, %arg6: memref<2x4x16x16xf32, #tpu.memory_space<vmem>>, %arg7: memref<2x4x16x16xf32, #tpu.memory_space<vmem>>) attributes {dimension_semantics = [], scalar_prefetch = 0 : i64, scratch_operands = 0 : i64, tpu.core_type = #tpu.core_type<tc>} {
    %0 = tpu.iota {dimensions = array<i32: 0>} : vector<16x16xi32>
    %1 = tpu.iota {dimensions = array<i32: 1>} : vector<16x16xi32>
    %c9_i32 = arith.constant 9 : i32
    %2 = vector.broadcast %c9_i32 : i32 to vector<16x16xi32>
    %3 = arith.cmpi slt, %0, %2 : vector<16x16xi32>
    %c9_i32_0 = arith.constant 9 : i32
    %4 = vector.broadcast %c9_i32_0 : i32 to vector<16x16xi32>
    %5 = arith.cmpi slt, %1, %4 : vector<16x16xi32>
    %6 = arith.andi %3, %5 : vector<16x16xi1>
    %c1_i32 = arith.constant 1 : i32
    %7 = vector.broadcast %c1_i32 : i32 to vector<16x16xi32>
    %8 = arith.cmpi sge, %0, %7 : vector<16x16xi32>
    %c1_i32_1 = arith.constant 1 : i32
    %9 = vector.broadcast %c1_i32_1 : i32 to vector<16x16xi32>
    %10 = arith.cmpi sge, %1, %9 : vector<16x16xi32>
    %11 = arith.andi %8, %10 : vector<16x16xi1>
    %12 = arith.andi %11, %6 : vector<16x16xi1>
    %c0_i32 = arith.constant 0 : i32
    %13 = vector.broadcast %c0_i32 : i32 to vector<16x16xi32>
    %14 = arith.cmpi eq, %0, %13 : vector<16x16xi32>
    %c0_i32_2 = arith.constant 0 : i32
    %15 = vector.broadcast %c0_i32_2 : i32 to vector<16x16xi32>
    %16 = arith.cmpi eq, %1, %15 : vector<16x16xi32>
    %17 = arith.ori %14, %16 : vector<16x16xi1>
    %18 = arith.andi %17, %6 : vector<16x16xi1>
    %19 = arith.extui %18 : vector<16x16xi1> to vector<16x16xi32>
    %20 = arith.sitofp %19 : vector<16x16xi32> to vector<16x16xf32>
    %c0 = arith.constant 0 : index
    %c0_3 = arith.constant 0 : index
    %c0_4 = arith.constant 0 : index
    %21 = vector.load %arg5[%c0, %c0_3, %c0_4] : memref<2x16x16xf32, #tpu.memory_space<vmem>>, vector<1x16x16xf32>
    %22 = vector.shape_cast %21 : vector<1x16x16xf32> to vector<16x16xf32>
    %cst = arith.constant 2.000000e+00 : f32
    %23 = vector.broadcast %cst : f32 to vector<16x16xf32>
    %24 = arith.mulf %23, %22 : vector<16x16xf32>
    %c1 = arith.constant 1 : index
    %25 = memref.load %arg0[%c1] : memref<2xi32, #tpu.memory_space<smem>>
    %c1_5 = arith.constant 1 : index
    %c0_6 = arith.constant 0 : index
    %c0_7 = arith.constant 0 : index
    %26 = vector.load %arg3[%c1_5, %c0_6, %c0_7] : memref<2x16x224xf32, #tpu.memory_space<vmem>>, vector<1x16x224xf32>
    %27 = vector.shape_cast %26 : vector<1x16x224xf32> to vector<16x224xf32>
    %c0_8 = arith.constant 0 : index
    %c0_9 = arith.constant 0 : index
    %28 = vector.load %arg4[%c0_8, %c0_9] : memref<224x64xf32, #tpu.memory_space<vmem>>, vector<224x64xf32>
    %cst_10 = arith.constant dense<0.000000e+00> : vector<16x64xf32>
    %29 = tpu.matmul %27, %28, %cst_10 {dimension_numbers = #tpu.dot_dimension_numbers<[1], [0], [0], [1], [0, 0, 1, 1], [], []>} : vector<16x224xf32>, vector<224x64xf32>, vector<16x64xf32> -> vector<16x64xf32>
    %c1_11 = arith.constant 1 : index
    %c0_12 = arith.constant 0 : index
    %c0_13 = arith.constant 0 : index
    %30 = vector.load %arg2[%c1_11, %c0_12, %c0_13] : memref<2x16x16xi32, #tpu.memory_space<vmem>>, vector<1x16x16xi32>
    %31 = vector.shape_cast %30 : vector<1x16x16xi32> to vector<16x16xi32>
    %32 = arith.sitofp %31 : vector<16x16xi32> to vector<16x16xf32>
    %cst_14 = arith.constant 1.000000e+00 : f32
    %cst_15 = arith.constant 2.000000e+00 : f32
    %33 = vector.broadcast %cst_14 : f32 to vector<16x16xf32>
    %34 = arith.maximumf %33, %32 : vector<16x16xf32>
    %35 = vector.broadcast %cst_15 : f32 to vector<16x16xf32>
    %36 = arith.minimumf %35, %34 : vector<16x16xf32>
    %c1_i32_16 = arith.constant 1 : i32
    %37 = vector.broadcast %c1_i32_16 : i32 to vector<16x16xi32>
    %38 = arith.cmpi sge, %0, %37 : vector<16x16xi32>
    %39 = vector.broadcast %25 : i32 to vector<16x16xi32>
    %40 = arith.cmpi sle, %0, %39 : vector<16x16xi32>
    %41 = arith.andi %38, %40 : vector<16x16xi1>
    %c1_i32_17 = arith.constant 1 : i32
    %42 = vector.broadcast %c1_i32_17 : i32 to vector<16x16xi32>
    %43 = arith.cmpi sge, %1, %42 : vector<16x16xi32>
    %44 = vector.broadcast %25 : i32 to vector<16x16xi32>
    %45 = arith.cmpi sle, %1, %44 : vector<16x16xi32>
    %46 = arith.andi %43, %45 : vector<16x16xi1>
    %47 = arith.andi %41, %46 : vector<16x16xi1>
    %48 = vector.extract_strided_slice %29 {offsets = [0, 0], sizes = [16, 16], strides = [1, 1]} : vector<16x64xf32> to vector<16x16xf32>
    %49 = arith.divf %48, %36 : vector<16x16xf32>
    %cst_18 = arith.constant -1.000000e+03 : f32
    %50 = vector.broadcast %cst_18 : f32 to vector<16x16xf32>
    %51 = arith.select %47, %49, %50 : vector<16x16xi1>, vector<16x16xf32>
    %c0_19 = arith.constant 0 : index
    %c0_20 = arith.constant 0 : index
    %c0_21 = arith.constant 0 : index
    %c0_22 = arith.constant 0 : index
    %52 = vector.load %arg6[%c0_19, %c0_20, %c0_21, %c0_22] : memref<2x4x16x16xf32, #tpu.memory_space<vmem>>, vector<1x1x16x16xf32>
    %53 = vector.shape_cast %52 : vector<1x1x16x16xf32> to vector<16x16xf32>
    %54 = arith.addf %53, %51 : vector<16x16xf32>
    %c0_23 = arith.constant 0 : index
    %55 = memref.load %arg1[%c0_23] : memref<4xf32, #tpu.memory_space<smem>>
    %56 = vector.broadcast %55 : f32 to vector<16x16xf32>
    %57 = arith.mulf %20, %56 : vector<16x16xf32>
    %58 = arith.select %12, %54, %57 : vector<16x16xi1>, vector<16x16xf32>
    %59 = arith.addf %24, %58 : vector<16x16xf32>
    %cst_24 = arith.constant -1.000000e+09 : f32
    %60 = vector.broadcast %cst_24 : f32 to vector<16x16xf32>
    %61 = arith.select %6, %59, %60 : vector<16x16xi1>, vector<16x16xf32>
    %c0_25 = arith.constant 0 : index
    %c0_26 = arith.constant 0 : index
    %c0_27 = arith.constant 0 : index
    %c0_28 = arith.constant 0 : index
    %62 = vector.load %arg7[%c0_25, %c0_26, %c0_27, %c0_28] : memref<2x4x16x16xf32, #tpu.memory_space<vmem>>, vector<1x1x16x16xf32>
    %63 = vector.shape_cast %62 : vector<1x1x16x16xf32> to vector<16x16xf32>
    %64 = vector.shape_cast %61 : vector<16x16xf32> to vector<1x1x16x16xf32>
    tpu.vector_store %arg7[%c0_25, %c0_26, %c0_27, %c0_28], %64 {strides = array<i32>} : memref<2x4x16x16xf32, #tpu.memory_space<vmem>>, vector<1x1x16x16xf32>,
    %65 = vector.extract_strided_slice %29 {offsets = [0, 16], sizes = [16, 16], strides = [1, 1]} : vector<16x64xf32> to vector<16x16xf32>
    %66 = arith.divf %65, %36 : vector<16x16xf32>
    %cst_29 = arith.constant -1.000000e+03 : f32
    %67 = vector.broadcast %cst_29 : f32 to vector<16x16xf32>
    %68 = arith.select %47, %66, %67 : vector<16x16xi1>, vector<16x16xf32>
    %c0_30 = arith.constant 0 : index
    %c1_31 = arith.constant 1 : index
    %c0_32 = arith.constant 0 : index
    %c0_33 = arith.constant 0 : index
    %69 = vector.load %arg6[%c0_30, %c1_31, %c0_32, %c0_33] : memref<2x4x16x16xf32, #tpu.memory_space<vmem>>, vector<1x1x16x16xf32>
    %70 = vector.shape_cast %69 : vector<1x1x16x16xf32> to vector<16x16xf32>
    %71 = arith.addf %70, %68 : vector<16x16xf32>
    %c1_34 = arith.constant 1 : index
    %72 = memref.load %arg1[%c1_34] : memref<4xf32, #tpu.memory_space<smem>>
    %73 = vector.broadcast %72 : f32 to vector<16x16xf32>
    %74 = arith.mulf %20, %73 : vector<16x16xf32>
    %75 = arith.select %12, %71, %74 : vector<16x16xi1>, vector<16x16xf32>
    %76 = arith.addf %24, %75 : vector<16x16xf32>
    %cst_35 = arith.constant -1.000000e+09 : f32
    %77 = vector.broadcast %cst_35 : f32 to vector<16x16xf32>
    %78 = arith.select %6, %76, %77 : vector<16x16xi1>, vector<16x16xf32>
    %c0_36 = arith.constant 0 : index
    %c1_37 = arith.constant 1 : index
    %c0_38 = arith.constant 0 : index
    %c0_39 = arith.constant 0 : index
    %79 = vector.load %arg7[%c0_36, %c1_37, %c0_38, %c0_39] : memref<2x4x16x16xf32, #tpu.memory_space<vmem>>, vector<1x1x16x16xf32>
    %80 = vector.shape_cast %79 : vector<1x1x16x16xf32> to vector<16x16xf32>
    %81 = vector.shape_cast %78 : vector<16x16xf32> to vector<1x1x16x16xf32>
    tpu.vector_store %arg7[%c0_36, %c1_37, %c0_38, %c0_39], %81 {strides = array<i32>} : memref<2x4x16x16xf32, #tpu.memory_space<vmem>>, vector<1x1x16x16xf32>,
    %82 = vector.extract_strided_slice %29 {offsets = [0, 32], sizes = [16, 16], strides = [1, 1]} : vector<16x64xf32> to vector<16x16xf32>
    %83 = arith.divf %82, %36 : vector<16x16xf32>
    %cst_40 = arith.constant -1.000000e+03 : f32
    %84 = vector.broadcast %cst_40 : f32 to vector<16x16xf32>
    %85 = arith.select %47, %83, %84 : vector<16x16xi1>, vector<16x16xf32>
    %c0_41 = arith.constant 0 : index
    %c2 = arith.constant 2 : index
    %c0_42 = arith.constant 0 : index
    %c0_43 = arith.constant 0 : index
    %86 = vector.load %arg6[%c0_41, %c2, %c0_42, %c0_43] : memref<2x4x16x16xf32, #tpu.memory_space<vmem>>, vector<1x1x16x16xf32>
    %87 = vector.shape_cast %86 : vector<1x1x16x16xf32> to vector<16x16xf32>
    %88 = arith.addf %87, %85 : vector<16x16xf32>
    %c2_44 = arith.constant 2 : index
    %89 = memref.load %arg1[%c2_44] : memref<4xf32, #tpu.memory_space<smem>>
    %90 = vector.broadcast %89 : f32 to vector<16x16xf32>
    %91 = arith.mulf %20, %90 : vector<16x16xf32>
    %92 = arith.select %12, %88, %91 : vector<16x16xi1>, vector<16x16xf32>
    %93 = arith.addf %24, %92 : vector<16x16xf32>
    %cst_45 = arith.constant -1.000000e+09 : f32
    %94 = vector.broadcast %cst_45 : f32 to vector<16x16xf32>
    %95 = arith.select %6, %93, %94 : vector<16x16xi1>, vector<16x16xf32>
    %c0_46 = arith.constant 0 : index
    %c2_47 = arith.constant 2 : index
    %c0_48 = arith.constant 0 : index
    %c0_49 = arith.constant 0 : index
    %96 = vector.load %arg7[%c0_46, %c2_47, %c0_48, %c0_49] : memref<2x4x16x16xf32, #tpu.memory_space<vmem>>, vector<1x1x16x16xf32>
    %97 = vector.shape_cast %96 : vector<1x1x16x16xf32> to vector<16x16xf32>
    %98 = vector.shape_cast %95 : vector<16x16xf32> to vector<1x1x16x16xf32>
    tpu.vector_store %arg7[%c0_46, %c2_47, %c0_48, %c0_49], %98 {strides = array<i32>} : memref<2x4x16x16xf32, #tpu.memory_space<vmem>>, vector<1x1x16x16xf32>,
    %99 = vector.extract_strided_slice %29 {offsets = [0, 48], sizes = [16, 16], strides = [1, 1]} : vector<16x64xf32> to vector<16x16xf32>
    %100 = arith.divf %99, %36 : vector<16x16xf32>
    %cst_50 = arith.constant -1.000000e+03 : f32
    %101 = vector.broadcast %cst_50 : f32 to vector<16x16xf32>
    %102 = arith.select %47, %100, %101 : vector<16x16xi1>, vector<16x16xf32>
    %c0_51 = arith.constant 0 : index
    %c3 = arith.constant 3 : index
    %c0_52 = arith.constant 0 : index
    %c0_53 = arith.constant 0 : index
    %103 = vector.load %arg6[%c0_51, %c3, %c0_52, %c0_53] : memref<2x4x16x16xf32, #tpu.memory_space<vmem>>, vector<1x1x16x16xf32>
    %104 = vector.shape_cast %103 : vector<1x1x16x16xf32> to vector<16x16xf32>
    %105 = arith.addf %104, %102 : vector<16x16xf32>
    %c3_54 = arith.constant 3 : index
    %106 = memref.load %arg1[%c3_54] : memref<4xf32, #tpu.memory_space<smem>>
    %107 = vector.broadcast %106 : f32 to vector<16x16xf32>
    %108 = arith.mulf %20, %107 : vector<16x16xf32>
    %109 = arith.select %12, %105, %108 : vector<16x16xi1>, vector<16x16xf32>
    %110 = arith.addf %24, %109 : vector<16x16xf32>
    %cst_55 = arith.constant -1.000000e+09 : f32
    %111 = vector.broadcast %cst_55 : f32 to vector<16x16xf32>
    %112 = arith.select %6, %110, %111 : vector<16x16xi1>, vector<16x16xf32>
    %c0_56 = arith.constant 0 : index
    %c3_57 = arith.constant 3 : index
    %c0_58 = arith.constant 0 : index
    %c0_59 = arith.constant 0 : index
    %113 = vector.load %arg7[%c0_56, %c3_57, %c0_58, %c0_59] : memref<2x4x16x16xf32, #tpu.memory_space<vmem>>, vector<1x1x16x16xf32>
    %114 = vector.shape_cast %113 : vector<1x1x16x16xf32> to vector<16x16xf32>
    %115 = vector.shape_cast %112 : vector<16x16xf32> to vector<1x1x16x16xf32>
    tpu.vector_store %arg7[%c0_56, %c3_57, %c0_58, %c0_59], %115 {strides = array<i32>} : memref<2x4x16x16xf32, #tpu.memory_space<vmem>>, vector<1x1x16x16xf32>,
    %c1_60 = arith.constant 1 : index
    %c0_61 = arith.constant 0 : index
    %c0_62 = arith.constant 0 : index
    %116 = vector.load %arg5[%c1_60, %c0_61, %c0_62] : memref<2x16x16xf32, #tpu.memory_space<vmem>>, vector<1x16x16xf32>
    %117 = vector.shape_cast %116 : vector<1x16x16xf32> to vector<16x16xf32>
    %cst_63 = arith.constant 2.000000e+00 : f32
    %118 = vector.broadcast %cst_63 : f32 to vector<16x16xf32>
    %119 = arith.mulf %118, %117 : vector<16x16xf32>
    %cst_64 = arith.constant -1.000000e+03 : f32
    %120 = vector.broadcast %cst_64 : f32 to vector<16x16xf32>
    %c1_65 = arith.constant 1 : index
    %c0_66 = arith.constant 0 : index
    %c0_67 = arith.constant 0 : index
    %c0_68 = arith.constant 0 : index
    %121 = vector.load %arg6[%c1_65, %c0_66, %c0_67, %c0_68] : memref<2x4x16x16xf32, #tpu.memory_space<vmem>>, vector<1x1x16x16xf32>
    %122 = vector.shape_cast %121 : vector<1x1x16x16xf32> to vector<16x16xf32>
    %123 = arith.addf %122, %120 : vector<16x16xf32>
    %c0_69 = arith.constant 0 : index
    %124 = memref.load %arg1[%c0_69] : memref<4xf32, #tpu.memory_space<smem>>
    %125 = vector.broadcast %124 : f32 to vector<16x16xf32>
    %126 = arith.mulf %20, %125 : vector<16x16xf32>
    %127 = arith.select %12, %123, %126 : vector<16x16xi1>, vector<16x16xf32>
    %128 = arith.addf %119, %127 : vector<16x16xf32>
    %cst_70 = arith.constant -1.000000e+09 : f32
    %129 = vector.broadcast %cst_70 : f32 to vector<16x16xf32>
    %130 = arith.select %6, %128, %129 : vector<16x16xi1>, vector<16x16xf32>
    %c1_71 = arith.constant 1 : index
    %c0_72 = arith.constant 0 : index
    %c0_73 = arith.constant 0 : index
    %c0_74 = arith.constant 0 : index
    %131 = vector.load %arg7[%c1_71, %c0_72, %c0_73, %c0_74] : memref<2x4x16x16xf32, #tpu.memory_space<vmem>>, vector<1x1x16x16xf32>
    %132 = vector.shape_cast %131 : vector<1x1x16x16xf32> to vector<16x16xf32>
    %133 = vector.shape_cast %130 : vector<16x16xf32> to vector<1x1x16x16xf32>
    tpu.vector_store %arg7[%c1_71, %c0_72, %c0_73, %c0_74], %133 {strides = array<i32>} : memref<2x4x16x16xf32, #tpu.memory_space<vmem>>, vector<1x1x16x16xf32>,
    %cst_75 = arith.constant -1.000000e+03 : f32
    %134 = vector.broadcast %cst_75 : f32 to vector<16x16xf32>
    %c1_76 = arith.constant 1 : index
    %c1_77 = arith.constant 1 : index
    %c0_78 = arith.constant 0 : index
    %c0_79 = arith.constant 0 : index
    %135 = vector.load %arg6[%c1_76, %c1_77, %c0_78, %c0_79] : memref<2x4x16x16xf32, #tpu.memory_space<vmem>>, vector<1x1x16x16xf32>
    %136 = vector.shape_cast %135 : vector<1x1x16x16xf32> to vector<16x16xf32>
    %137 = arith.addf %136, %134 : vector<16x16xf32>
    %c1_80 = arith.constant 1 : index
    %138 = memref.load %arg1[%c1_80] : memref<4xf32, #tpu.memory_space<smem>>
    %139 = vector.broadcast %138 : f32 to vector<16x16xf32>
    %140 = arith.mulf %20, %139 : vector<16x16xf32>
    %141 = arith.select %12, %137, %140 : vector<16x16xi1>, vector<16x16xf32>
    %142 = arith.addf %119, %141 : vector<16x16xf32>
    %cst_81 = arith.constant -1.000000e+09 : f32
    %143 = vector.broadcast %cst_81 : f32 to vector<16x16xf32>
    %144 = arith.select %6, %142, %143 : vector<16x16xi1>, vector<16x16xf32>
    %c1_82 = arith.constant 1 : index
    %c1_83 = arith.constant 1 : index
    %c0_84 = arith.constant 0 : index
    %c0_85 = arith.constant 0 : index
    %145 = vector.load %arg7[%c1_82, %c1_83, %c0_84, %c0_85] : memref<2x4x16x16xf32, #tpu.memory_space<vmem>>, vector<1x1x16x16xf32>
    %146 = vector.shape_cast %145 : vector<1x1x16x16xf32> to vector<16x16xf32>
    %147 = vector.shape_cast %144 : vector<16x16xf32> to vector<1x1x16x16xf32>
    tpu.vector_store %arg7[%c1_82, %c1_83, %c0_84, %c0_85], %147 {strides = array<i32>} : memref<2x4x16x16xf32, #tpu.memory_space<vmem>>, vector<1x1x16x16xf32>,
    %cst_86 = arith.constant -1.000000e+03 : f32
    %148 = vector.broadcast %cst_86 : f32 to vector<16x16xf32>
    %c1_87 = arith.constant 1 : index
    %c2_88 = arith.constant 2 : index
    %c0_89 = arith.constant 0 : index
    %c0_90 = arith.constant 0 : index
    %149 = vector.load %arg6[%c1_87, %c2_88, %c0_89, %c0_90] : memref<2x4x16x16xf32, #tpu.memory_space<vmem>>, vector<1x1x16x16xf32>
    %150 = vector.shape_cast %149 : vector<1x1x16x16xf32> to vector<16x16xf32>
    %151 = arith.addf %150, %148 : vector<16x16xf32>
    %c2_91 = arith.constant 2 : index
    %152 = memref.load %arg1[%c2_91] : memref<4xf32, #tpu.memory_space<smem>>
    %153 = vector.broadcast %152 : f32 to vector<16x16xf32>
    %154 = arith.mulf %20, %153 : vector<16x16xf32>
    %155 = arith.select %12, %151, %154 : vector<16x16xi1>, vector<16x16xf32>
    %156 = arith.addf %119, %155 : vector<16x16xf32>
    %cst_92 = arith.constant -1.000000e+09 : f32
    %157 = vector.broadcast %cst_92 : f32 to vector<16x16xf32>
    %158 = arith.select %6, %156, %157 : vector<16x16xi1>, vector<16x16xf32>
    %c1_93 = arith.constant 1 : index
    %c2_94 = arith.constant 2 : index
    %c0_95 = arith.constant 0 : index
    %c0_96 = arith.constant 0 : index
    %159 = vector.load %arg7[%c1_93, %c2_94, %c0_95, %c0_96] : memref<2x4x16x16xf32, #tpu.memory_space<vmem>>, vector<1x1x16x16xf32>
    %160 = vector.shape_cast %159 : vector<1x1x16x16xf32> to vector<16x16xf32>
    %161 = vector.shape_cast %158 : vector<16x16xf32> to vector<1x1x16x16xf32>
    tpu.vector_store %arg7[%c1_93, %c2_94, %c0_95, %c0_96], %161 {strides = array<i32>} : memref<2x4x16x16xf32, #tpu.memory_space<vmem>>, vector<1x1x16x16xf32>,
    %cst_97 = arith.constant -1.000000e+03 : f32
    %162 = vector.broadcast %cst_97 : f32 to vector<16x16xf32>
    %c1_98 = arith.constant 1 : index
    %c3_99 = arith.constant 3 : index
    %c0_100 = arith.constant 0 : index
    %c0_101 = arith.constant 0 : index
    %163 = vector.load %arg6[%c1_98, %c3_99, %c0_100, %c0_101] : memref<2x4x16x16xf32, #tpu.memory_space<vmem>>, vector<1x1x16x16xf32>
    %164 = vector.shape_cast %163 : vector<1x1x16x16xf32> to vector<16x16xf32>
    %165 = arith.addf %164, %162 : vector<16x16xf32>
    %c3_102 = arith.constant 3 : index
    %166 = memref.load %arg1[%c3_102] : memref<4xf32, #tpu.memory_space<smem>>
    %167 = vector.broadcast %166 : f32 to vector<16x16xf32>
    %168 = arith.mulf %20, %167 : vector<16x16xf32>
    %169 = arith.select %12, %165, %168 : vector<16x16xi1>, vector<16x16xf32>
    %170 = arith.addf %119, %169 : vector<16x16xf32>
    %cst_103 = arith.constant -1.000000e+09 : f32
    %171 = vector.broadcast %cst_103 : f32 to vector<16x16xf32>
    %172 = arith.select %6, %170, %171 : vector<16x16xi1>, vector<16x16xf32>
    %c1_104 = arith.constant 1 : index
    %c3_105 = arith.constant 3 : index
    %c0_106 = arith.constant 0 : index
    %c0_107 = arith.constant 0 : index
    %173 = vector.load %arg7[%c1_104, %c3_105, %c0_106, %c0_107] : memref<2x4x16x16xf32, #tpu.memory_space<vmem>>, vector<1x1x16x16xf32>
    %174 = vector.shape_cast %173 : vector<1x1x16x16xf32> to vector<16x16xf32>
    %175 = vector.shape_cast %172 : vector<16x16xf32> to vector<1x1x16x16xf32>
    tpu.vector_store %arg7[%c1_104, %c3_105, %c0_106, %c0_107], %175 {strides = array<i32>} : memref<2x4x16x16xf32, #tpu.memory_space<vmem>>, vector<1x1x16x16xf32>,
    return
  }
}

</mosaic_0001>

<llo_original>
// kernel: tpu_custom_call.1
$region0: #{tpu_custom_call.1}
  #allocation0 [shape = 'u32[]', space=smem, size = 0x4, offset = 0x4, fixed_abs, tag = 'smem constant byte address 0x4 - core index']
  #allocation1 [shape = 'u32[144,128]{1,0:T(1,128)}', space=vmem, size = 0x12000, scoped, tag = 'internal scratch']
  %s0 = inlined_call_operand.vmem [shape: s32[2], index: 0, kind: input, shape index: {}]
  %s1 = inlined_call_operand.vmem [shape: f32[4], index: 1, kind: input, shape index: {}]
  %s2 = inlined_call_operand.vmem [shape: s32[2,16,16], index: 2, kind: input, shape index: {}]
  %s3 = inlined_call_operand.vmem [shape: f32[2,16,224], index: 3, kind: input, shape index: {}]
  %s4 = inlined_call_operand.vmem [shape: f32[224,64], index: 4, kind: input, shape index: {}]
  %s5 = inlined_call_operand.vmem [shape: f32[2,16,16], index: 5, kind: input, shape index: {}]
  %s6 = inlined_call_operand.vmem [shape: f32[2,4,16,16], index: 6, kind: input, shape index: {}]
  %s7 = inlined_call_operand.hbm [shape: f32[2,4,16,16], index: 7, kind: output, shape index: {}]
  %s8 = sld [smem:[#allocation0]]
  $region46: #{tpu_custom_call.1} parent=0
    _
  %s10 = ssub.s32 1, %s8
  %s11 = scalar_select 0, %s10, %s8
  $region1: #{tpu_custom_call.1} parent=0
    #allocation2 [shape = 'u8[512]{0}', space=smem, size = 0x200, scoped, tag = 'input window, operand 0, single buffered']
    #allocation3 [shape = 's32[1]{0}', space=sflag, size = 0x4, scoped, tag = 'scoped memory for tpu_custom_call.1']
    #allocation4 [shape = 's32[1]{0}', space=sflag, size = 0x4, scoped, tag = 'scoped memory for tpu_custom_call.1']
    #allocation5 [shape = 'u8[512]{0}', space=smem, size = 0x200, scoped, tag = 'input window, operand 1, single buffered']
    #allocation6 [shape = 's32[1]{0}', space=sflag, size = 0x4, scoped, tag = 'scoped memory for tpu_custom_call.1']
    #allocation7 [shape = 'u8[65536]{0}', space=vmem, size = 0x10000, scoped, tag = 'output window, operand 0, single buffered']
    %12 = vsyncpa [#allocation4], 0
    %13 = vsyncpa [#allocation6], 0
    %14 = vsyncpa [#allocation3], 0
    // Predicated region
    $region2: #{tpu_custom_call.1} parent=1 // pred_check
      _
    $region3: #{tpu_custom_call.1} parent=1 // pred_check_branch
      %16 = sbr.rel (0) target = $region5
    $region4: #{tpu_custom_call.1} parent=1 // pred_region
      %s18 = ssub.s32 16, 16
      %19 = vsyncadd [#allocation4], %s18
      %s21 = sshll.u32 %s0, 4
      %s22 = int_to_ptr.vmem [resolvable:$true] %s21
      %24 = dma.vmem_to_smem %s22, 16, [#allocation2], [#allocation4]
    $region5: #{tpu_custom_call.1} parent=1 // pred_fallthru
      _
    // Predicated region
    $region6: #{tpu_custom_call.1} parent=1 // pred_check
      _
    $region7: #{tpu_custom_call.1} parent=1 // pred_check_branch
      %26 = sbr.rel (0) target = $region9
    $region8: #{tpu_custom_call.1} parent=1 // pred_region
      %s28 = ssub.s32 16, 16
      %29 = vsyncadd [#allocation6], %s28
      %s31 = sshll.u32 %s1, 4
      %s32 = int_to_ptr.vmem [resolvable:$true] %s31
      %34 = dma.vmem_to_smem %s32, 16, [#allocation5], [#allocation6]
    $region9: #{tpu_custom_call.1} parent=1 // pred_fallthru
      _
    // Predicated region
    $region10: #{tpu_custom_call.1} parent=1 // pred_check
      _
    $region11: #{tpu_custom_call.1} parent=1 // pred_check_branch
      %36 = sbr.rel (0) target = $region13
    $region12: #{tpu_custom_call.1} parent=1 // pred_region
      _
    $region13: #{tpu_custom_call.1} parent=1 // pred_fallthru
      _
    // Predicated region
    $region14: #{tpu_custom_call.1} parent=1 // pred_check
      _
    $region15: #{tpu_custom_call.1} parent=1 // pred_check_branch
      %38 = sbr.rel (0) target = $region17
    $region16: #{tpu_custom_call.1} parent=1 // pred_region
      _
    $region17: #{tpu_custom_call.1} parent=1 // pred_fallthru
      _
    // Predicated region
    $region18: #{tpu_custom_call.1} parent=1 // pred_check
      _
    $region19: #{tpu_custom_call.1} parent=1 // pred_check_branch
      %40 = sbr.rel (0) target = $region21
    $region20: #{tpu_custom_call.1} parent=1 // pred_region
      _
    $region21: #{tpu_custom_call.1} parent=1 // pred_fallthru
      _
    // Predicated region
    $region22: #{tpu_custom_call.1} parent=1 // pred_check
      _
    $region23: #{tpu_custom_call.1} parent=1 // pred_check_branch
      %42 = sbr.rel (0) target = $region25
    $region24: #{tpu_custom_call.1} parent=1 // pred_region
      _
    $region25: #{tpu_custom_call.1} parent=1 // pred_fallthru
      _
    // Predicated region
    $region26: #{tpu_custom_call.1} parent=1 // pred_check
      _
    $region27: #{tpu_custom_call.1} parent=1 // pred_check_branch
      %44 = sbr.rel (0) target = $region29
    $region28: #{tpu_custom_call.1} parent=1 // pred_region
      _
    $region29: #{tpu_custom_call.1} parent=1 // pred_fallthru
      _
    // Predicated region
    $region30: #{tpu_custom_call.1} parent=1 // pred_check
      _
    $region31: #{tpu_custom_call.1} parent=1 // pred_check_branch
      %46 = sbr.rel (0) target = $region33
    $region32: #{tpu_custom_call.1} parent=1 // pred_region
      %47 = dma.done [#allocation4], 16
    $region33: #{tpu_custom_call.1} parent=1 // pred_fallthru
      _
    // Predicated region
    $region34: #{tpu_custom_call.1} parent=1 // pred_check
      _
    $region35: #{tpu_custom_call.1} parent=1 // pred_check_branch
      %49 = sbr.rel (0) target = $region37
    $region36: #{tpu_custom_call.1} parent=1 // pred_region
      %50 = dma.done [#allocation6], 16
    $region37: #{tpu_custom_call.1} parent=1 // pred_fallthru
      _
    %51 = sfence
    %v52 = vlaneseq
    %v53 = vshrl.u32 %v52, 7
    %v54 = vadd.s32 %v53, 8
    %v55 = vlaneseq
    %v56 = vand.u32 %v55, 127
    %vm57 = vcmp.lt.s32.totalorder %v53, 9
    %vm58 = vcmp.lt.s32.totalorder %v54, 9
    %vm59 = vcmp.lt.s32.totalorder %v56, 9
    %vm60 = vmand %vm57, %vm59
    %vm61 = vmand %vm58, %vm59
    %vm62 = vcmp.ge.s32.totalorder %v53, 1
    %vm63 = vcmp.ge.s32.totalorder %v54, 1
    %vm64 = vcmp.ge.s32.totalorder %v56, 1
    %vm65 = vmand %vm62, %vm64
    %vm66 = vmand %vm63, %vm64
    %vm67 = vmand %vm65, %vm60
    %vm68 = vmand %vm66, %vm61
    %vm69 = vcmp.eq.s32.totalorder %v53, 0
    %vm70 = vcmp.eq.s32.totalorder %v54, 0
    %vm71 = vcmp.eq.s32.totalorder %v56, 0
    %vm72 = vmor %vm69, %vm71
    %vm73 = vmor %vm70, %vm71
    %vm74 = vmand %vm72, %vm60
    %vm75 = vmand %vm73, %vm61
    %v76 = vsel %vm74, 1, 0
    %v77 = vsel %vm75, 1, 0
    %v78 = vcvt.s32.f32 %v76
    %v79 = vcvt.s32.f32 %v77
    %v80 = vld [vmem:[%s5] sm:$0xff]
    %v81 = vld [vmem:[%s5 + $0x8] sm:$0xff]
    %v82 = vmul.f32 %v80, 2.0
    %v83 = vmul.f32 %v81, 2.0
    %s84 = sld [smem:[#allocation2 + $0x1]]
    %s85 = scalar_lea.vmem %s3, 32
    %v86 = vld [vmem:[%s85] sm:$0xff]
    %v87 = vld [vmem:[%s85 + $0x8] sm:$0xff]
    %v88 = vld [vmem:[%s85 + $0x10] sm:$0xff]
    %v89 = vld [vmem:[%s85 + $0x18] sm:$0xff]
    %v90 = vld [vmem:[%s4] sm:$0xff]
    %v91 = vld [vmem:[%s4 + $0x8] sm:$0xff]
    %v92 = vld [vmem:[%s4 + $0x10] sm:$0xff]
    %v93 = vld [vmem:[%s4 + $0x18] sm:$0xff]
    %v94 = vld [vmem:[%s4 + $0x20] sm:$0xff]
    %v95 = vld [vmem:[%s4 + $0x28] sm:$0xff]
    %v96 = vld [vmem:[%s4 + $0x30] sm:$0xff]
    %v97 = vld [vmem:[%s4 + $0x38] sm:$0xff]
    %v98 = vld [vmem:[%s4 + $0x40] sm:$0xff]
    %v99 = vld [vmem:[%s4 + $0x48] sm:$0xff]
    %v100 = vld [vmem:[%s4 + $0x50] sm:$0xff]
    %v101 = vld [vmem:[%s4 + $0x58] sm:$0xff]
    %v102 = vld [vmem:[%s4 + $0x60] sm:$0xff]
    %v103 = vld [vmem:[%s4 + $0x68] sm:$0xff]
    %v104 = vld [vmem:[%s4 + $0x70] sm:$0xff]
    %v105 = vld [vmem:[%s4 + $0x78] sm:$0xff]
    %v106 = vld [vmem:[%s4 + $0x80] sm:$0xff]
    %v107 = vld [vmem:[%s4 + $0x88] sm:$0xff]
    %v108 = vld [vmem:[%s4 + $0x90] sm:$0xff]
    %v109 = vld [vmem:[%s4 + $0x98] sm:$0xff]
    %v110 = vld [vmem:[%s4 + $0xa0] sm:$0xff]
    %v111 = vld [vmem:[%s4 + $0xa8] sm:$0xff]
    %v112 = vld [vmem:[%s4 + $0xb0] sm:$0xff]
    %v113 = vld [vmem:[%s4 + $0xb8] sm:$0xff]
    %v114 = vld [vmem:[%s4 + $0xc0] sm:$0xff]
    %v115 = vld [vmem:[%s4 + $0xc8] sm:$0xff]
    %v116 = vld [vmem:[%s4 + $0xd0] sm:$0xff]
    %v117 = vld [vmem:[%s4 + $0xd8] sm:$0xff]
    %vm118 = vcmask 785408
    %v120 = vsel %vm118, %v87, 0
    %v123 = vsel %vm118, %v89, 0
    %125 = vmatprep.subr.mxu0 0.0
    %126 = vmatpush1.msra.mxu0 %v90
    %127 = vmatprep.subr.mxu0 0.0
    %128 = vmatpush1.msra.mxu0 %v91
    %129 = vmatprep.subr.mxu0 0.0
    %130 = vmatpush1.msra.mxu0 %v92
    %131 = vmatprep.subr.mxu0 0.0
    %132 = vmatpush1.msra.mxu0 %v93
    %133 = vmatprep.subr.mxu0 0.0
    %134 = vmatpush1.msra.mxu0 %v94
    %135 = vmatprep.subr.mxu0 0.0
    %136 = vmatpush1.msra.mxu0 %v95
    %137 = vmatprep.subr.mxu0 0.0
    %138 = vmatpush1.msra.mxu0 %v96
    %139 = vmatprep.subr.mxu0 0.0
    %140 = vmatpush1.msra.mxu0 %v97
    %141 = vmatprep.subr.mxu0 0.0
    %142 = vmatpush1.msra.mxu0 %v98
    %143 = vmatprep.subr.mxu0 0.0
    %144 = vmatpush1.msra.mxu0 %v99
    %145 = vmatprep.subr.mxu0 0.0
    %146 = vmatpush1.msra.mxu0 %v100
    %147 = vmatprep.subr.mxu0 0.0
    %148 = vmatpush1.msra.mxu0 %v101
    %149 = vmatprep.subr.mxu0 0.0
    %150 = vmatpush1.msra.mxu0 %v102
    %151 = vmatprep.subr.mxu0 0.0
    %152 = vmatpush1.msra.mxu0 %v103
    %153 = vmatprep.subr.mxu0 0.0
    %154 = vmatpush1.msra.mxu0 %v104
    %155 = vmatprep.subr.mxu0 0.0
    %156 = vmatpush1.msra.mxu0 %v105
    %157 = vmatprep.subr.mxu0 0.0
    %158 = vmatpush1.msra.mxu0 %v106
    %159 = vmatprep.subr.mxu0 0.0
    %160 = vmatpush1.msra.mxu0 %v107
    %161 = vmatprep.subr.mxu0 0.0
    %162 = vmatpush1.msra.mxu0 %v108
    %163 = vmatprep.subr.mxu0 0.0
    %164 = vmatpush1.msra.mxu0 %v109
    %165 = vmatprep.subr.mxu0 0.0
    %166 = vmatpush1.msra.mxu0 %v110
    %167 = vmatprep.subr.mxu0 0.0
    %168 = vmatpush1.msra.mxu0 %v111
    %169 = vmatprep.subr.mxu0 0.0
    %170 = vmatpush1.msra.mxu0 %v112
    %171 = vmatprep.subr.mxu0 0.0
    %172 = vmatpush1.msra.mxu0 %v113
    %173 = vmatprep.subr.mxu0 0.0
    %174 = vmatpush1.msra.mxu0 %v114
    %175 = vmatprep.subr.mxu0 0.0
    %176 = vmatpush1.msra.mxu0 %v115
    %177 = vmatprep.subr.mxu0 0.0
    %178 = vmatpush1.msra.mxu0 %v116
    %179 = vmatprep.subr.mxu0 0.0
    %180 = vmatpush1.msra.mxu0 %v117
    %181 = vmatprep.subr.mxu0 0.0
    %182 = vmatpush1.msra.mxu0 0.0
    %183 = vmatprep.subr.mxu0 0.0
    %184 = vmatpush1.msra.mxu0 0.0
    %185 = vmatprep.subr.mxu0 0.0
    %186 = vmatpush1.msra.mxu0 0.0
    %187 = vmatprep.subr.mxu0 0.0
    %188 = vmatpush1.msra.mxu0 0.0
    %189 = vmatprep.mubr.f32.mxu0 %v120
    %190 = vmatmul.mubr.f32.gmra.mrb[0].mxu0 %v86
    %v191 = vpop.f32.mrb[0].mxu0
    %v192 = vadd.f32 0.0, %v191
    %v193 = vpop.f32.mrb[0].mxu0
    %194 = vmatprep.mubr.f32.mxu0 %v123
    %195 = vmatmul.mubr.f32.gmra.mrb[0].mxu0 %v88
    %v196 = vpop.f32.mrb[0].mxu0
    %v197 = vadd.f32 0.0, %v196
    %v198 = vpop.f32.mrb[0].mxu0
    %199 = vdwg.mxu0
    %s200 = scalar_lea.vmem %s2, 16
    %v201 = vld [vmem:[%s200] sm:$0xff]
    %v202 = vld [vmem:[%s200 + $0x8] sm:$0xff]
    %v203 = vcvt.s32.f32 %v201
    %v204 = vcvt.s32.f32 %v202
    %v205 = vmax.f32 %v203, 1.0
    %v206 = vmax.f32 %v204, 1.0
    %v207 = vmin.f32 %v205, 2.0
    %v208 = vmin.f32 %v206, 2.0
    %v209 = vstv %s84
    %vm210 = vcmp.le.s32.totalorder %v53, %v209
    %vm211 = vcmp.le.s32.totalorder %v54, %v209
    %vm212 = vmand %vm62, %vm210
    %vm213 = vmand %vm63, %vm211
    %vm214 = vcmp.le.s32.totalorder %v56, %v209
    %vm215 = vmand %vm64, %vm214
    %vm216 = vmand %vm212, %vm215
    %vm217 = vmand %vm213, %vm215
    %v218 = vrcp.pop %v207
    %v219 = vmul.f32 %v192, %v218
    %v220 = vrcp.pop %v208
    %v221 = vmul.f32 %v197, %v220
    %v222 = vsel %vm216, %v219, -1000.0
    %v223 = vsel %vm217, %v221, -1000.0
    %v224 = vld [vmem:[%s6] sm:$0xff]
    %v225 = vld [vmem:[%s6 + $0x8] sm:$0xff]
    %v226 = vadd.f32 %v224, %v222
    %v227 = vadd.f32 %v225, %v223
    %s228 = sld [smem:[#allocation5]]
    %v229 = vstv %s228
    %v230 = vmul.f32 %v78, %v229
    %v231 = vmul.f32 %v79, %v229
    %v232 = vsel %vm67, %v226, %v230
    %v233 = vsel %vm68, %v227, %v231
    %v234 = vadd.f32 %v82, %v232
    %v235 = vadd.f32 %v83, %v233
    %v236 = vsel %vm60, %v234, -1e+09
    %v237 = vsel %vm61, %v235, -1e+09
    %vm238 = vcmask 130048
    %239 = vst.msk [vmem:[#allocation7] sm:$0xff] %vm238, %v236
    %240 = vst.msk [vmem:[#allocation7 + $0x8] sm:$0xff] %vm238, %v237
    %243 = vrot.lane.b32.xlu0 %v207, 16
    %v244 = vpop.permute.xlu0 %243
    %245 = vrot.lane.b32.xlu0 %v208, 16
    %v246 = vpop.permute.xlu0 %245
    %v249 = vrcp.pop %v244
    %v250 = vmul.f32 %v192, %v249
    %v251 = vrcp.pop %v246
    %v252 = vmul.f32 %v197, %v251
    %255 = vrot.lane.b32.xlu0 %v250, 112
    %v256 = vpop.permute.xlu0 %255
    %257 = vrot.lane.b32.xlu0 %v252, 112
    %v258 = vpop.permute.xlu0 %257
    %v261 = vsel %vm216, %v256, -1000.0
    %v262 = vsel %vm217, %v258, -1000.0
    %s263 = scalar_lea.vmem %s6, 16
    %v264 = vld [vmem:[%s263] sm:$0xff]
    %v265 = vld [vmem:[%s263 + $0x8] sm:$0xff]
    %v266 = vadd.f32 %v264, %v261
    %v267 = vadd.f32 %v265, %v262
    %s268 = sld [smem:[#allocation5 + $0x1]]
    %v269 = vstv %s268
    %v270 = vmul.f32 %v78, %v269
    %v271 = vmul.f32 %v79, %v269
    %v272 = vsel %vm67, %v266, %v270
    %v273 = vsel %vm68, %v267, %v271
    %v274 = vadd.f32 %v82, %v272
    %v275 = vadd.f32 %v83, %v273
    %v276 = vsel %vm60, %v274, -1e+09
    %v277 = vsel %vm61, %v275, -1e+09
    %s278 = scalar_lea.vmem [#allocation7], 16
    %279 = vst.msk [vmem:[%s278] sm:$0xff] %vm238, %v276
    %280 = vst.msk [vmem:[%s278 + $0x8] sm:$0xff] %vm238, %v277
    %281 = vrot.lane.b32.xlu0 %v207, 32
    %v282 = vpop.permute.xlu0 %281
    %283 = vrot.lane.b32.xlu0 %v208, 32
    %v284 = vpop.permute.xlu0 %283
    %v287 = vrcp.pop %v282
    %v288 = vmul.f32 %v192, %v287
    %v289 = vrcp.pop %v284
    %v290 = vmul.f32 %v197, %v289
    %293 = vrot.lane.b32.xlu0 %v288, 96
    %v294 = vpop.permute.xlu0 %293
    %295 = vrot.lane.b32.xlu0 %v290, 96
    %v296 = vpop.permute.xlu0 %295
    %v299 = vsel %vm216, %v294, -1000.0
    %v300 = vsel %vm217, %v296, -1000.0
    %s301 = scalar_lea.vmem %s6, 32
    %v302 = vld [vmem:[%s301] sm:$0xff]
    %v303 = vld [vmem:[%s301 + $0x8] sm:$0xff]
    %v304 = vadd.f32 %v302, %v299
    %v305 = vadd.f32 %v303, %v300
    %s306 = sld [smem:[#allocation5 + $0x2]]
    %v307 = vstv %s306
    %v308 = vmul.f32 %v78, %v307
    %v309 = vmul.f32 %v79, %v307
    %v310 = vsel %vm67, %v304, %v308
    %v311 = vsel %vm68, %v305, %v309
    %v312 = vadd.f32 %v82, %v310
    %v313 = vadd.f32 %v83, %v311
    %v314 = vsel %vm60, %v312, -1e+09
    %v315 = vsel %vm61, %v313, -1e+09
    %s316 = scalar_lea.vmem [#allocation7], 32
    %317 = vst.msk [vmem:[%s316] sm:$0xff] %vm238, %v314
    %318 = vst.msk [vmem:[%s316 + $0x8] sm:$0xff] %vm238, %v315
    %319 = vrot.lane.b32.xlu0 %v207, 48
    %v320 = vpop.permute.xlu0 %319
    %321 = vrot.lane.b32.xlu0 %v208, 48
    %v322 = vpop.permute.xlu0 %321
    %v325 = vrcp.pop %v320
    %v326 = vmul.f32 %v192, %v325
    %v327 = vrcp.pop %v322
    %v328 = vmul.f32 %v197, %v327
    %331 = vrot.lane.b32.xlu0 %v326, 80
    %v332 = vpop.permute.xlu0 %331
    %333 = vrot.lane.b32.xlu0 %v328, 80
    %v334 = vpop.permute.xlu0 %333
    %v337 = vsel %vm216, %v332, -1000.0
    %v338 = vsel %vm217, %v334, -1000.0
    %s339 = scalar_lea.vmem %s6, 48
    %v340 = vld [vmem:[%s339] sm:$0xff]
    %v341 = vld [vmem:[%s339 + $0x8] sm:$0xff]
    %v342 = vadd.f32 %v340, %v337
    %v343 = vadd.f32 %v341, %v338
    %s344 = sld [smem:[#allocation5 + $0x3]]
    %v345 = vstv %s344
    %v346 = vmul.f32 %v78, %v345
    %v347 = vmul.f32 %v79, %v345
    %v348 = vsel %vm67, %v342, %v346
    %v349 = vsel %vm68, %v343, %v347
    %v350 = vadd.f32 %v82, %v348
    %v351 = vadd.f32 %v83, %v349
    %v352 = vsel %vm60, %v350, -1e+09
    %v353 = vsel %vm61, %v351, -1e+09
    %s354 = scalar_lea.vmem [#allocation7], 48
    %355 = vst.msk [vmem:[%s354] sm:$0xff] %vm238, %v352
    %356 = vst.msk [vmem:[%s354 + $0x8] sm:$0xff] %vm238, %v353
    %s357 = scalar_lea.vmem %s5, 16
    %v358 = vld [vmem:[%s357] sm:$0xff]
    %v359 = vld [vmem:[%s357 + $0x8] sm:$0xff]
    %v360 = vmul.f32 %v358, 2.0
    %v361 = vmul.f32 %v359, 2.0
    %s362 = scalar_lea.vmem %s6, 64
    %v363 = vld [vmem:[%s362] sm:$0xff]
    %v364 = vld [vmem:[%s362 + $0x8] sm:$0xff]
    %v365 = vadd.f32 %v363, -1000.0
    %v366 = vadd.f32 %v364, -1000.0
    %s367 = sld [smem:[#allocation5]]
    %v368 = vstv %s367
    %v369 = vmul.f32 %v78, %v368
    %v370 = vmul.f32 %v79, %v368
    %v371 = vsel %vm67, %v365, %v369
    %v372 = vsel %vm68, %v366, %v370
    %v373 = vadd.f32 %v360, %v371
    %v374 = vadd.f32 %v361, %v372
    %v375 = vsel %vm60, %v373, -1e+09
    %v376 = vsel %vm61, %v374, -1e+09
    %s377 = scalar_lea.vmem [#allocation7], 64
    %378 = vst.msk [vmem:[%s377] sm:$0xff] %vm238, %v375
    %379 = vst.msk [vmem:[%s377 + $0x8] sm:$0xff] %vm238, %v376
    %s380 = scalar_lea.vmem %s6, 80
    %v381 = vld [vmem:[%s380] sm:$0xff]
    %v382 = vld [vmem:[%s380 + $0x8] sm:$0xff]
    %v383 = vadd.f32 %v381, -1000.0
    %v384 = vadd.f32 %v382, -1000.0
    %s385 = sld [smem:[#allocation5 + $0x1]]
    %v386 = vstv %s385
    %v387 = vmul.f32 %v78, %v386
    %v388 = vmul.f32 %v79, %v386
    %v389 = vsel %vm67, %v383, %v387
    %v390 = vsel %vm68, %v384, %v388
    %v391 = vadd.f32 %v360, %v389
    %v392 = vadd.f32 %v361, %v390
    %v393 = vsel %vm60, %v391, -1e+09
    %v394 = vsel %vm61, %v392, -1e+09
    %s395 = scalar_lea.vmem [#allocation7], 80
    %396 = vst.msk [vmem:[%s395] sm:$0xff] %vm238, %v393
    %397 = vst.msk [vmem:[%s395 + $0x8] sm:$0xff] %vm238, %v394
    %s398 = scalar_lea.vmem %s6, 96
    %v399 = vld [vmem:[%s398] sm:$0xff]
    %v400 = vld [vmem:[%s398 + $0x8] sm:$0xff]
    %v401 = vadd.f32 %v399, -1000.0
    %v402 = vadd.f32 %v400, -1000.0
    %s403 = sld [smem:[#allocation5 + $0x2]]
    %v404 = vstv %s403
    %v405 = vmul.f32 %v78, %v404
    %v406 = vmul.f32 %v79, %v404
    %v407 = vsel %vm67, %v401, %v405
    %v408 = vsel %vm68, %v402, %v406
    %v409 = vadd.f32 %v360, %v407
    %v410 = vadd.f32 %v361, %v408
    %v411 = vsel %vm60, %v409, -1e+09
    %v412 = vsel %vm61, %v410, -1e+09
    %s413 = scalar_lea.vmem [#allocation7], 96
    %414 = vst.msk [vmem:[%s413] sm:$0xff] %vm238, %v411
    %415 = vst.msk [vmem:[%s413 + $0x8] sm:$0xff] %vm238, %v412
    %s416 = scalar_lea.vmem %s6, 112
    %v417 = vld [vmem:[%s416] sm:$0xff]
    %v418 = vld [vmem:[%s416 + $0x8] sm:$0xff]
    %v419 = vadd.f32 %v417, -1000.0
    %v420 = vadd.f32 %v418, -1000.0
    %s421 = sld [smem:[#allocation5 + $0x3]]
    %v422 = vstv %s421
    %v423 = vmul.f32 %v78, %v422
    %v424 = vmul.f32 %v79, %v422
    %v425 = vsel %vm67, %v419, %v423
    %v426 = vsel %vm68, %v420, %v424
    %v427 = vadd.f32 %v360, %v425
    %v428 = vadd.f32 %v361, %v426
    %v429 = vsel %vm60, %v427, -1e+09
    %v430 = vsel %vm61, %v428, -1e+09
    %s431 = scalar_lea.vmem [#allocation7], 112
    %432 = vst.msk [vmem:[%s431] sm:$0xff] %vm238, %v429
    %433 = vst.msk [vmem:[%s431 + $0x8] sm:$0xff] %vm238, %v430
    // Predicated region
    $region38: #{tpu_custom_call.1} parent=1 // pred_check
      _
    $region39: #{tpu_custom_call.1} parent=1 // pred_check_branch
      %435 = sbr.rel (0) target = $region41
    $region40: #{tpu_custom_call.1} parent=1 // pred_region
      %s437 = ssub.s32 2048, 2048
      %438 = vsyncadd [#allocation3], %s437
      %s439 = sshll.u32 [#allocation7], 4
      %s440 = int_to_ptr.vmem [resolvable:$true] %s439
      %445 = dma.vmem_to_hbm [thread:$0]  %s440, 2048, %s7, [#allocation3], 128, 128, 8
    $region41: #{tpu_custom_call.1} parent=1 // pred_fallthru
      _
    // Predicated region
    $region42: #{tpu_custom_call.1} parent=1 // pred_check
      _
    $region43: #{tpu_custom_call.1} parent=1 // pred_check_branch
      %447 = sbr.rel (0) target = $region45
    $region44: #{tpu_custom_call.1} parent=1 // pred_region
      %448 = dma.done [#allocation3], 2048
    $region45: #{tpu_custom_call.1} parent=1 // pred_fallthru
      _
    %449 = vsyncpa [#allocation3], 1
    %450 = vsyncpa [#allocation4], 1
    %451 = vsyncpa [#allocation6], 1

</llo_original>
